<compile_context>
chip_gen: v7x
topology: tpu7x:2x2x1
jax: 0.10.0
libtpu: 0.0.40
codegen_flags: <defaults>
</compile_context>

<pallas_src>
import functools

import jax
import jax.numpy as jnp
from jax.experimental import pallas as pl
from jax.experimental.pallas import tpu as pltpu


def _round_up(a, b):
    return (a + b - 1) // b * b


def _patch_embed_kernel(x_ref, w_ref, p_ref, o_ref, *, eps, inv_n):
    # x_ref: (tm, K)   patch rows, native dtype (fed straight to the MXU)
    # w_ref: (K, Np)   projection weight, zero-padded to lane-dense Np
    # p_ref: (3, Np)   packed [conv bias; LN gamma; LN beta], f32, zero-padded
    # o_ref: (tm, Np)
    y = jnp.dot(x_ref[...], w_ref[...], preferred_element_type=jnp.float32)
    p = p_ref[...].astype(jnp.float32)
    y = y + p[0:1, :]                       # conv bias

    # Single-pass LayerNorm stats over the real embed_dim columns.  Padded
    # columns are exact zeros (zero weight cols + zero bias), so they do not
    # perturb the sums; divide by the real N via the baked-in inv_n.
    row_sum = jnp.sum(y, axis=-1, keepdims=True)
    row_sumsq = jnp.sum(y * y, axis=-1, keepdims=True)
    mean = row_sum * inv_n
    # Guard against catastrophic cancellation making the variance negative.
    var = jnp.maximum(row_sumsq * inv_n - mean * mean, 0.0)
    inv_std = jax.lax.rsqrt(var + eps)

    out = (y - mean) * inv_std
    out = out * p[1:2, :] + p[2:3, :]       # LN affine (padded cols stay 0)
    o_ref[...] = out.astype(o_ref.dtype)


def patch_embed_forward(x, conv_w, conv_b, ln_gamma, ln_beta,
                        patch_size=(4, 4), eps=1e-5, tm=None):
    """x: [B, C, H, W] (NCHW).  Returns (out [B, num_patches, embed_dim], (Hp, Wp))."""
    B, C, H, W = x.shape
    ph, pw = patch_size
    Hp, Wp = H // ph, W // pw
    num_patches = Hp * Wp
    embed_dim = conv_w.shape[0]
    K = C * ph * pw
    M = B * num_patches

    # --- glue: extract non-overlapping patches, flatten to [M, K] ---
    # [B, C, Hp, ph, Wp, pw] -> [B, Hp, Wp, C, ph, pw] -> [M, K]
    # No padding on M, so allow_input_fusion (below) can fuse this straight
    # into the kernel's input DMA instead of materializing x2d in HBM.
    xp = x.reshape(B, C, Hp, ph, Wp, pw).transpose(0, 2, 4, 1, 3, 5)
    x2d = xp.reshape(M, K)

    dbytes = jnp.dtype(x.dtype).itemsize
    sub = max(8, 32 // dbytes)              # sublane packing (8 f32, 16 bf16)
    Np = _round_up(embed_dim, 128)          # lane-dense output width

    # --- VMEM budget (v7x has only 64 MiB physical) ---
    try:
        vmem_cap = int(pltpu.get_tpu_info().vmem_capacity_bytes)
    except Exception:
        vmem_cap = 64 << 20                 # assume the smallest (v7x)
    hard_cap = vmem_cap - (8 << 20)         # headroom for internal scratch

    # --- M tile sized from the per-row footprint, not a fixed 512 cap ---
    resident = 2 * K * Np * dbytes + 2 * 3 * Np * 4          # weight + params
    per_row = 2 * K * dbytes + 2 * Np * dbytes + 2 * Np * 4  # x/out bufs + f32 temps
    tile_budget = max(hard_cap // 2 - resident, 1 << 20)
    if tm is None:
        tm = min(2048, tile_budget // per_row, _round_up(M, sub))
        tm = max(sub, (tm // sub) * sub)
        # Guarantee >= 2 grid steps so the "parallel" axis can shard across
        # both v7x TensorCores.
        if M > sub and pl.cdiv(M, tm) < 2:
            tm = max(sub, _round_up(pl.cdiv(M, 2), sub))
    else:
        tm = max(sub, _round_up(tm, sub))

    grid = (pl.cdiv(M, tm),)                # ragged last block is fine

    # --- weights / packed LN params, zero-padded to lane-dense Np ---
    w2d = conv_w.reshape(embed_dim, K).T.astype(x.dtype)           # (K, N)
    params = jnp.stack([conv_b, ln_gamma, ln_beta]).astype(jnp.float32)  # (3, N)
    if Np != embed_dim:
        w2d = jnp.pad(w2d, ((0, 0), (0, Np - embed_dim)))
        params = jnp.pad(params, ((0, 0), (0, Np - embed_dim)))

    # Explicit VMEM request, always below physical capacity.
    est = (2 * tm * K * dbytes            # x tiles (double-buffered)
           + 2 * tm * Np * dbytes         # out tiles (double-buffered)
           + 2 * K * Np * dbytes          # weight buffers
           + 2 * 3 * Np * 4               # packed params
           + 2 * tm * Np * 4)             # in-kernel f32 temporaries
    vmem_limit = int(min(hard_cap, max(32 << 20, 2 * est)))

    def _invariant_spec(shape):
        # Grid-invariant operand: single pipeline buffer (its block index
        # never changes, so the 2nd buffer is wasted VMEM).  Fall back to the
        # default if this jax version lacks the pipeline_mode kwarg.
        try:
            return pl.BlockSpec(shape, lambda i: (0, 0),
                                pipeline_mode=pl.Buffered(1))
        except TypeError:
            return pl.BlockSpec(shape, lambda i: (0, 0))

    out2d = pl.pallas_call(
        functools.partial(_patch_embed_kernel, eps=eps, inv_n=1.0 / embed_dim),
        out_shape=jax.ShapeDtypeStruct((M, Np), x.dtype),
        grid_spec=pltpu.PrefetchScalarGridSpec(
            num_scalar_prefetch=0,
            grid=grid,
            in_specs=[
                pl.BlockSpec((tm, K), lambda i: (i, 0)),   # patch rows
                _invariant_spec((K, Np)),                  # weight (resident)
                _invariant_spec((3, Np)),                  # bias/gamma/beta
            ],
            out_specs=pl.BlockSpec((tm, Np), lambda i: (i, 0)),
        ),
        compiler_params=pltpu.CompilerParams(
            dimension_semantics=("parallel",),
            vmem_limit_bytes=vmem_limit,
            allow_input_fusion=[True, False, False],
        ),
    )(x2d, w2d, params)

    out = out2d if Np == embed_dim else out2d[:, :embed_dim]
    out = out.reshape(B, num_patches, embed_dim)
    return out, (Hp, Wp)


def _reference(x, conv_w, conv_b, ln_gamma, ln_beta, patch_size=(4, 4), eps=1e-5):
    """Pure-JAX reference matching the PyTorch forward."""
    B, C, H, W = x.shape
    ph, pw = patch_size
    y = jax.lax.conv_general_dilated(
        x, conv_w, window_strides=(ph, pw), padding="VALID",
        dimension_numbers=("NCHW", "OIHW", "NCHW"))
    y = y + conv_b.reshape(1, -1, 1, 1)
    # flatten(2).transpose(1, 2)
    y = y.reshape(B, y.shape[1], -1).transpose(0, 2, 1)
    mean = jnp.mean(y, axis=-1, keepdims=True)
    var = jnp.mean((y - mean) ** 2, axis=-1, keepdims=True)
    y = (y - mean) / jnp.sqrt(var + eps)
    y = y * ln_gamma + ln_beta
    return y, (H // ph, W // pw)


if __name__ == "__main__":
    # Small shapes consistent with the module: img=16, patch=4, C=4, embed=32.
    B, C, H, W = 2, 4, 16, 16
    ph, pw = 4, 4
    embed_dim = 32

    key = jax.random.PRNGKey(0)
    kx, kw, kb = jax.random.split(key, 3)

    x = jax.random.normal(kx, (B, C, H, W), dtype=jnp.float32)
    conv_w = jax.random.normal(kw, (embed_dim, C, ph, pw), dtype=jnp.float32) * 0.02
    conv_b = jax.random.normal(kb, (embed_dim,), dtype=jnp.float32) * 0.02
    ln_gamma = jnp.ones((embed_dim,), dtype=jnp.float32)
    ln_beta = jnp.zeros((embed_dim,), dtype=jnp.float32)

    out, (Hp, Wp) = patch_embed_forward(
        x, conv_w, conv_b, ln_gamma, ln_beta, patch_size=(ph, pw))
    out = jax.block_until_ready(out)

    ref, (Hr, Wr) = _reference(
        x, conv_w, conv_b, ln_gamma, ln_beta, patch_size=(ph, pw))

    assert out.shape == (B, (H // ph) * (W // pw), embed_dim)
    assert (Hp, Wp) == (Hr, Wr) == (H // ph, W // pw)
    assert jnp.max(jnp.abs(out - ref)) < 1e-4

    print("KERNEL_OK")
</pallas_src>

<mosaic_0001>
module attributes {stable_mosaic.version = 11 : i64} {
  func.func @_patch_embed_kernel(%arg0: i32, %arg1: memref<16x64xf32, #tpu.memory_space<vmem>>, %arg2: memref<64x128xf32, #tpu.memory_space<vmem>>, %arg3: memref<3x128xf32, #tpu.memory_space<vmem>>, %arg4: memref<16x128xf32, #tpu.memory_space<vmem>>) attributes {dimension_semantics = [#tpu.dimension_semantics<parallel>], iteration_bounds = array<i64: 2>, scalar_prefetch = 0 : i64, scratch_operands = 0 : i64, tpu.core_type = #tpu.core_type<tc>, window_params = [{transform_indices = @transform_0, window_bounds = array<i64: 16, 64>}, {pipeline_mode = #tpu.pipeline_mode<synchronous>, transform_indices = @transform_1, window_bounds = array<i64: 64, 128>}, {pipeline_mode = #tpu.pipeline_mode<synchronous>, transform_indices = @transform_2, window_bounds = array<i64: 3, 128>}, {transform_indices = @transform_3, window_bounds = array<i64: 16, 128>}]} {
    %c0 = arith.constant 0 : index
    %c0_0 = arith.constant 0 : index
    %0 = vector.load %arg1[%c0, %c0_0] : memref<16x64xf32, #tpu.memory_space<vmem>>, vector<16x64xf32>
    %c0_1 = arith.constant 0 : index
    %c0_2 = arith.constant 0 : index
    %1 = vector.load %arg2[%c0_1, %c0_2] : memref<64x128xf32, #tpu.memory_space<vmem>>, vector<64x128xf32>
    %cst = arith.constant dense<0.000000e+00> : vector<16x128xf32>
    %2 = tpu.matmul %0, %1, %cst {dimension_numbers = #tpu.dot_dimension_numbers<[1], [0], [0], [1], [0, 0, 1, 1], [], []>} : vector<16x64xf32>, vector<64x128xf32>, vector<16x128xf32> -> vector<16x128xf32>
    %c0_3 = arith.constant 0 : index
    %c0_4 = arith.constant 0 : index
    %3 = vector.load %arg3[%c0_3, %c0_4] : memref<3x128xf32, #tpu.memory_space<vmem>>, vector<3x128xf32>
    %4 = vector.extract_strided_slice %3 {offsets = [0, 0], sizes = [1, 128], strides = [1, 1]} : vector<3x128xf32> to vector<1x128xf32>
    %5 = vector.broadcast %4 : vector<1x128xf32> to vector<16x128xf32>
    %6 = arith.addf %2, %5 : vector<16x128xf32>
    %cst_5 = arith.constant dense<0.000000e+00> : vector<16xf32>
    %7 = vector.multi_reduction <add>, %6, %cst_5 [1] : vector<16x128xf32> to vector<16xf32>
    %8 = vector.shape_cast %7 : vector<16xf32> to vector<16x1xf32>
    %9 = arith.mulf %6, %6 : vector<16x128xf32>
    %cst_6 = arith.constant dense<0.000000e+00> : vector<16xf32>
    %10 = vector.multi_reduction <add>, %9, %cst_6 [1] : vector<16x128xf32> to vector<16xf32>
    %11 = vector.shape_cast %10 : vector<16xf32> to vector<16x1xf32>
    %cst_7 = arith.constant 3.125000e-02 : f32
    %12 = vector.broadcast %cst_7 : f32 to vector<16x1xf32>
    %13 = arith.mulf %8, %12 : vector<16x1xf32>
    %cst_8 = arith.constant 3.125000e-02 : f32
    %14 = vector.broadcast %cst_8 : f32 to vector<16x1xf32>
    %15 = arith.mulf %11, %14 : vector<16x1xf32>
    %16 = arith.mulf %13, %13 : vector<16x1xf32>
    %17 = arith.subf %15, %16 : vector<16x1xf32>
    %cst_9 = arith.constant 0.000000e+00 : f32
    %18 = vector.broadcast %cst_9 : f32 to vector<16x1xf32>
    %19 = arith.maximumf %17, %18 : vector<16x1xf32>
    %cst_10 = arith.constant 9.99999974E-6 : f32
    %20 = vector.broadcast %cst_10 : f32 to vector<16x1xf32>
    %21 = arith.addf %19, %20 : vector<16x1xf32>
    %22 = math.rsqrt %21 : vector<16x1xf32>
    %23 = vector.broadcast %13 : vector<16x1xf32> to vector<16x128xf32>
    %24 = arith.subf %6, %23 : vector<16x128xf32>
    %25 = vector.broadcast %22 : vector<16x1xf32> to vector<16x128xf32>
    %26 = arith.mulf %24, %25 : vector<16x128xf32>
    %27 = vector.extract_strided_slice %3 {offsets = [1, 0], sizes = [1, 128], strides = [1, 1]} : vector<3x128xf32> to vector<1x128xf32>
    %28 = vector.broadcast %27 : vector<1x128xf32> to vector<16x128xf32>
    %29 = arith.mulf %26, %28 : vector<16x128xf32>
    %30 = vector.extract_strided_slice %3 {offsets = [2, 0], sizes = [1, 128], strides = [1, 1]} : vector<3x128xf32> to vector<1x128xf32>
    %31 = vector.broadcast %30 : vector<1x128xf32> to vector<16x128xf32>
    %32 = arith.addf %29, %31 : vector<16x128xf32>
    %c0_11 = arith.constant 0 : index
    %c0_12 = arith.constant 0 : index
    %33 = vector.load %arg4[%c0_11, %c0_12] : memref<16x128xf32, #tpu.memory_space<vmem>>, vector<16x128xf32>
    tpu.vector_store %arg4[%c0_11, %c0_12], %32 {strides = array<i32>} : memref<16x128xf32, #tpu.memory_space<vmem>>, vector<16x128xf32>,
    return
  }
  func.func @transform_0(%arg0: i32) -> (i32, i32) {
    %c0_i32 = arith.constant 0 : i32
    %c0_i32_0 = arith.constant 0 : i32
    return %arg0, %c0_i32 : i32, i32
  }
  func.func @transform_1(%arg0: i32) -> (i32, i32) {
    %c0_i32 = arith.constant 0 : i32
    %c0_i32_0 = arith.constant 0 : i32
    %c0_i32_1 = arith.constant 0 : i32
    return %c0_i32, %c0_i32_0 : i32, i32
  }
  func.func @transform_2(%arg0: i32) -> (i32, i32) {
    %c0_i32 = arith.constant 0 : i32
    %c0_i32_0 = arith.constant 0 : i32
    %c0_i32_1 = arith.constant 0 : i32
    return %c0_i32, %c0_i32_0 : i32, i32
  }
  func.func @transform_3(%arg0: i32) -> (i32, i32) {
    %c0_i32 = arith.constant 0 : i32
    %c0_i32_0 = arith.constant 0 : i32
    return %arg0, %c0_i32 : i32, i32
  }
}

</mosaic_0001>

<llo_original>
// kernel: tpu_custom_call.1
$region0: #{tpu_custom_call.1}
  #allocation0 [shape = 'u32[]', space=smem, size = 0x4, offset = 0x4, fixed_abs, tag = 'smem constant byte address 0x4 - core index']
  #allocation1 [shape = 'u32[144,128]{1,0:T(1,128)}', space=vmem, size = 0x12000, scoped, tag = 'internal scratch']
  %s0 = inlined_call_operand.hbm [shape: f32[32,64], index: 0, kind: input, shape index: {}]
  %s1 = inlined_call_operand.hbm [shape: f32[64,128], index: 1, kind: input, shape index: {}]
  %s2 = inlined_call_operand.vmem [shape: f32[3,128], index: 2, kind: input, shape index: {}]
  %s3 = inlined_call_operand.hbm [shape: f32[32,128], index: 3, kind: output, shape index: {}]
  %s4 = sld [smem:[#allocation0]]
  $region53: #{tpu_custom_call.1} parent=0
    _
  %s6 = ssub.s32 1, %s4
  %s7 = scalar_select 0, %s6, %s4
  $region1: #{tpu_custom_call.1} parent=0
    #allocation2 [shape = 'u8[16384]{0}', space=vmem, size = 0x4000, scoped, tag = 'input window, operand 0']
    #allocation3 [shape = 's32[2]{0}', space=sflag, size = 0x8, scoped, tag = 'scoped memory for tpu_custom_call.1']
    #allocation4 [shape = 's32[2]{0}', space=sflag, size = 0x8, scoped, tag = 'scoped memory for tpu_custom_call.1']
    #allocation5 [shape = 'u8[32768]{0}', space=vmem, size = 0x8000, scoped, tag = 'input window, operand 1, single buffered']
    #allocation6 [shape = 's32[1]{0}', space=sflag, size = 0x4, scoped, tag = 'scoped memory for tpu_custom_call.1']
    #allocation7 [shape = 'u8[16384]{0}', space=vmem, size = 0x4000, scoped, tag = 'output window, operand 0']
    %8 = vsyncpa [#allocation3], 0
    %s9 = scalar_lea.sflag [#allocation3], 1
    %10 = vsyncpa %s9, 0
    %11 = vsyncpa [#allocation6], 0
    %12 = vsyncpa [#allocation4], 0
    %s13 = scalar_lea.sflag [#allocation4], 1
    %14 = vsyncpa %s13, 0
    loop: start=0, step=1, limit=4
    $region2: #{tpu_custom_call.1} parent=1 // loop_pre_header
      _
    $region3: #{tpu_custom_call.1} parent=1 // loop_header
      %s16 = sphi 0, %s20
      %p17 = scmp.ge.s32.totalorder %s16, 4
      %s26 = sphi 0, %s28
      %s29 = sphi 0, %s26
      %s30 = sphi 0, %s29
      %s46 = sphi 0, %s30
      %s50 = sphi 0, %s50
      %s52 = sphi 0, %s50
      %s53 = sphi 0, %s52
      %s67 = sphi 0, %s53
      %s71 = sphi 0, %s71
      %s73 = sphi 0, %s71
      %s74 = sphi 0, %s73
      %s88 = sphi 0, %s74
      %s94 = sphi 0, %s96
      %s97 = sphi 0, %s94
      %s98 = sphi 0, %s97
      %s114 = sphi 0, %s98
    $region4: #{tpu_custom_call.1} parent=1 // loop_header_branch
      %19 = sbr.rel (%p17) target = $region8
    $region5: #{tpu_custom_call.1} parent=1 // loop_body
      %s21 = ssub.s32 %s16, 1
      %s22 = ssub.s32 %s16, 2
      %s23 = sadd.s32 %s16, 1
      %s24 = ssub.s32 %s16, %s23
      %p25 = scmp.eq.s32.totalorder %s24, 0
      %s27 = sadd.s32 %s26, 1
      %s28 = scalar_select %p25, %s26, %s27
      %p31 = pneg %p25
      %p32 = scmp.eq.s32.totalorder %s16, 1
      %p33 = por %p31, %p32
      %p34 = scmp.ne.s32.totalorder %s26, %s29
      %p35 = scmp.eq.s32.totalorder %s16, 0
      %p36 = por %p34, %p35
      %p37 = scmp.ne.s32.totalorder %s26, %s29
      %p38 = scmp.eq.s32.totalorder %s21, 1
      %p39 = por %p37, %p38
      %p40 = scmp.ne.s32.totalorder %s29, %s30
      %p41 = scmp.eq.s32.totalorder %s21, 0
      %p42 = por %p40, %p41
      %p43 = scmp.ne.s32.totalorder %s29, %s30
      %p44 = scmp.eq.s32.totalorder %s22, 1
      %p45 = por %p43, %p44
      %p47 = scmp.ne.s32.totalorder %s30, %s46
      %p48 = scmp.eq.s32.totalorder %s22, 0
      %p49 = por %p47, %p48
      %s51 = sadd.s32 %s50, 1
      %p54 = scmp.eq.s32.totalorder %s16, 1
      %p55 = scmp.ne.s32.totalorder %s50, %s52
      %p56 = scmp.eq.s32.totalorder %s16, 0
      %p57 = por %p55, %p56
      %p58 = scmp.ne.s32.totalorder %s50, %s52
      %p59 = scmp.eq.s32.totalorder %s21, 1
      %p60 = por %p58, %p59
      %p61 = scmp.ne.s32.totalorder %s52, %s53
      %p62 = scmp.eq.s32.totalorder %s21, 0
      %p63 = por %p61, %p62
      %p64 = scmp.ne.s32.totalorder %s52, %s53
      %p65 = scmp.eq.s32.totalorder %s22, 1
      %p66 = por %p64, %p65
      %p68 = scmp.ne.s32.totalorder %s53, %s67
      %p69 = scmp.eq.s32.totalorder %s22, 0
      %p70 = por %p68, %p69
      %s72 = sadd.s32 %s71, 1
      %p75 = scmp.eq.s32.totalorder %s16, 1
      %p76 = scmp.ne.s32.totalorder %s71, %s73
      %p77 = scmp.eq.s32.totalorder %s16, 0
      %p78 = por %p76, %p77
      %p79 = scmp.ne.s32.totalorder %s71, %s73
      %p80 = scmp.eq.s32.totalorder %s21, 1
      %p81 = por %p79, %p80
      %p82 = scmp.ne.s32.totalorder %s73, %s74
      %p83 = scmp.eq.s32.totalorder %s21, 0
      %p84 = por %p82, %p83
      %p85 = scmp.ne.s32.totalorder %s73, %s74
      %p86 = scmp.eq.s32.totalorder %s22, 1
      %p87 = por %p85, %p86
      %p89 = scmp.ne.s32.totalorder %s74, %s88
      %p90 = scmp.eq.s32.totalorder %s22, 0
      %p91 = por %p89, %p90
      %s92 = ssub.s32 %s16, %s23
      %p93 = scmp.eq.s32.totalorder %s92, 0
      %s95 = sadd.s32 %s94, 1
      %s96 = scalar_select %p93, %s94, %s95
      %p99 = pneg %p93
      %p100 = scmp.eq.s32.totalorder %s16, 1
      %p101 = por %p99, %p100
      %p102 = scmp.ne.s32.totalorder %s94, %s97
      %p103 = scmp.eq.s32.totalorder %s16, 0
      %p104 = por %p102, %p103
      %p105 = scmp.ne.s32.totalorder %s94, %s97
      %p106 = scmp.eq.s32.totalorder %s21, 1
      %p107 = por %p105, %p106
      %p108 = scmp.ne.s32.totalorder %s97, %s98
      %p109 = scmp.eq.s32.totalorder %s21, 0
      %p110 = por %p108, %p109
      %p111 = scmp.ne.s32.totalorder %s97, %s98
      %p112 = scmp.eq.s32.totalorder %s22, 1
      %p113 = por %p111, %p112
      %p115 = scmp.ne.s32.totalorder %s98, %s114
      %p116 = scmp.eq.s32.totalorder %s22, 0
      %p117 = por %p115, %p116
      %p118 = scmp.le.s32.totalorder 1, %s16
      %p119 = scmp.lt.s32.totalorder %s16, 3
      %p120 = pnand %p118, %p119
      %p121 = pneg %p120
      // Predicated region
      $region9: #{tpu_custom_call.1} parent=5 // pred_check
        _
      $region10: #{tpu_custom_call.1} parent=5 // pred_check_branch
        %123 = sbr.rel (%p120) target = $region12
      $region11: #{tpu_custom_call.1} parent=5 // pred_region
        %s124 = ssub.s32 %s16, 1
        // Predicated region
        $region13: #{tpu_custom_call.1} parent=11 // pred_check
          %p125 = pneg %p63
        $region14: #{tpu_custom_call.1} parent=11 // pred_check_branch
          %127 = sbr.rel (%p125) target = $region16
        $region15: #{tpu_custom_call.1} parent=11 // pred_region
          %s129 = ssub.s32 1024, 1024
          %130 = vsyncadd [#allocation6], %s129
          %s131 = sshll.u32 [#allocation5], 4
          %s132 = int_to_ptr.vmem [resolvable:$true] %s131
          %137 = dma.hbm_to_vmem [thread:$0]  %s1, 1024, %s132, [#allocation6], 128, 128, 8
        $region16: #{tpu_custom_call.1} parent=11 // pred_fallthru
          _
        // Predicated region
        $region17: #{tpu_custom_call.1} parent=11 // pred_check
          %p138 = pneg %p84
        $region18: #{tpu_custom_call.1} parent=11 // pred_check_branch
          %140 = sbr.rel (%p138) target = $region20
        $region19: #{tpu_custom_call.1} parent=11 // pred_region
          _
        $region20: #{tpu_custom_call.1} parent=11 // pred_fallthru
          _
      $region12: #{tpu_custom_call.1} parent=5 // pred_fallthru
        _
      %p141 = scmp.lt.s32.totalorder %s16, 2
      // Predicated region
      $region21: #{tpu_custom_call.1} parent=5 // pred_check
        %p142 = pneg %p141
      $region22: #{tpu_custom_call.1} parent=5 // pred_check_branch
        %144 = sbr.rel (%p142) target = $region24
      $region23: #{tpu_custom_call.1} parent=5 // pred_region
        // Predicated region
        $region25: #{tpu_custom_call.1} parent=23 // pred_check
          %p145 = pneg %p36
        $region26: #{tpu_custom_call.1} parent=23 // pred_check_branch
          %147 = sbr.rel (%p145) target = $region28
        $region27: #{tpu_custom_call.1} parent=23 // pred_region
          %s148 = sand.u32 %s26, 1
          %s149 = scalar_lea.sflag [#allocation3], %s148
          %s150 = sand.u32 %s26, 1
          %s151 = smul.addr %s150, 16
          %s152 = scalar_lea.vmem [#allocation2], %s151
          %s153 = smul.u32 2, %s16
          %s155 = ssub.s32 256, 256
          %156 = vsyncadd %s149, %s155
          %s157 = smul.addr %s153, 128
          %s158 = scalar_lea.hbm %s0, %s157
          %s159 = sshll.u32 %s152, 4
          %s160 = int_to_ptr.vmem [resolvable:$true] %s159
          %165 = dma.hbm_to_vmem [thread:$0]  %s158, 256, %s160, %s149, 128, 128, 8
        $region28: #{tpu_custom_call.1} parent=23 // pred_fallthru
          _
      $region24: #{tpu_custom_call.1} parent=5 // pred_fallthru
        _
      %p166 = scmp.le.s32.totalorder 1, %s16
      %p167 = scmp.lt.s32.totalorder %s16, 3
      %p168 = pnand %p166, %p167
      %p169 = pneg %p168
      // Predicated region
      $region29: #{tpu_custom_call.1} parent=5 // pred_check
        _
      $region30: #{tpu_custom_call.1} parent=5 // pred_check_branch
        %171 = sbr.rel (%p168) target = $region32
      $region31: #{tpu_custom_call.1} parent=5 // pred_region
        %s172 = ssub.s32 %s16, 1
        %s173 = sand.u32 %s29, 1
        %s174 = scalar_lea.sflag [#allocation3], %s173
        %s175 = sand.u32 %s29, 1
        %s176 = smul.addr %s175, 16
        %s177 = scalar_lea.vmem [#allocation2], %s176
        // Predicated region
        $region33: #{tpu_custom_call.1} parent=31 // pred_check
          %p178 = pneg %p42
        $region34: #{tpu_custom_call.1} parent=31 // pred_check_branch
          %180 = sbr.rel (%p178) target = $region36
        $region35: #{tpu_custom_call.1} parent=31 // pred_region
          %181 = dma.done %s174, 256
        $region36: #{tpu_custom_call.1} parent=31 // pred_fallthru
          _
        // Predicated region
        $region37: #{tpu_custom_call.1} parent=31 // pred_check
          %p182 = pneg %p63
        $region38: #{tpu_custom_call.1} parent=31 // pred_check_branch
          %184 = sbr.rel (%p182) target = $region40
        $region39: #{tpu_custom_call.1} parent=31 // pred_region
          %185 = dma.done [#allocation6], 1024
        $region40: #{tpu_custom_call.1} parent=31 // pred_fallthru
          _
        %s186 = sand.u32 %s29, 1
        %s187 = scalar_lea.sflag [#allocation3], %s186
        %s188 = sand.u32 %s29, 1
        %s189 = smul.addr %s188, 16
        %s190 = scalar_lea.vmem [#allocation2], %s189
        %p191 = pneg %p42
        %p192 = pneg %p39
        %p193 = pneg %p63
        %p194 = pneg %p60
        %p195 = pneg %p84
        %p196 = pneg %p81
        %p197 = pneg %p110
        %p198 = pneg %p107
        %s199 = sand.u32 %s97, 1
        %s200 = scalar_lea.sflag [#allocation4], %s199
        %s201 = sand.u32 %s97, 1
        %s202 = smul.addr %s201, 16
        %s203 = scalar_lea.vmem [#allocation7], %s202
        %s204 = smul.u32 2, %s21
        %s205 = smul.u32 2, %s21
        %v206 = vld [vmem:[%s177] sm:$0xff]
        %v207 = vld [vmem:[%s177 + $0x8] sm:$0xff]
        %v208 = vld [vmem:[#allocation5] sm:$0xff]
        %v209 = vld [vmem:[#allocation5 + $0x8] sm:$0xff]
        %v210 = vld [vmem:[#allocation5 + $0x10] sm:$0xff]
        %v211 = vld [vmem:[#allocation5 + $0x18] sm:$0xff]
        %v212 = vld [vmem:[#allocation5 + $0x20] sm:$0xff]
        %v213 = vld [vmem:[#allocation5 + $0x28] sm:$0xff]
        %v214 = vld [vmem:[#allocation5 + $0x30] sm:$0xff]
        %v215 = vld [vmem:[#allocation5 + $0x38] sm:$0xff]
        %v216 = vld [vmem:[%s2] sm:$0x7]
        %v217 = vlaneseq
        %v218 = vshrl.u32 %v217, 7
        %v219 = vsub.s32 0, %v218
        %v220 = vrot.slane %v216, %v219
        %vm221 = vcmask 523264
        %v223 = vsel %vm221, %v206, 0
        %v226 = vsel %vm221, %v207, 0
        %228 = vmatprep.subr.mxu0 0.0
        %229 = vmatpush1.msra.mxu0 %v208
        %230 = vmatprep.subr.mxu0 0.0
        %231 = vmatpush1.msra.mxu0 %v209
        %232 = vmatprep.subr.mxu0 0.0
        %233 = vmatpush1.msra.mxu0 %v210
        %234 = vmatprep.subr.mxu0 0.0
        %235 = vmatpush1.msra.mxu0 %v211
        %236 = vmatprep.subr.mxu0 0.0
        %237 = vmatpush1.msra.mxu0 %v212
        %238 = vmatprep.subr.mxu0 0.0
        %239 = vmatpush1.msra.mxu0 %v213
        %240 = vmatprep.subr.mxu0 0.0
        %241 = vmatpush1.msra.mxu0 %v214
        %242 = vmatprep.subr.mxu0 0.0
        %243 = vmatpush1.msra.mxu0 %v215
        %244 = vmatprep.subr.mxu0 0.0
        %245 = vmatpush1.msra.mxu0 0.0
        %246 = vmatprep.subr.mxu0 0.0
        %247 = vmatpush1.msra.mxu0 0.0
        %248 = vmatprep.subr.mxu0 0.0
        %249 = vmatpush1.msra.mxu0 0.0
        %250 = vmatprep.subr.mxu0 0.0
        %251 = vmatpush1.msra.mxu0 0.0
        %252 = vmatprep.subr.mxu0 0.0
        %253 = vmatpush1.msra.mxu0 0.0
        %254 = vmatprep.subr.mxu0 0.0
        %255 = vmatpush1.msra.mxu0 0.0
        %256 = vmatprep.subr.mxu0 0.0
        %257 = vmatpush1.msra.mxu0 0.0
        %258 = vmatprep.subr.mxu0 0.0
        %259 = vmatpush1.msra.mxu0 0.0
        %260 = vmatprep.subr.mxu0 0.0
        %261 = vmatpush1.msra.mxu0 0.0
        %262 = vmatprep.subr.mxu0 0.0
        %263 = vmatpush1.msra.mxu0 0.0
        %264 = vmatprep.subr.mxu0 0.0
        %265 = vmatpush1.msra.mxu0 0.0
        %266 = vmatprep.subr.mxu0 0.0
        %267 = vmatpush1.msra.mxu0 0.0
        %268 = vmatprep.subr.mxu0 0.0
        %269 = vmatpush1.msra.mxu0 0.0
        %270 = vmatprep.subr.mxu0 0.0
        %271 = vmatpush1.msra.mxu0 0.0
        %272 = vmatprep.subr.mxu0 0.0
        %273 = vmatpush1.msra.mxu0 0.0
        %274 = vmatprep.subr.mxu0 0.0
        %275 = vmatpush1.msra.mxu0 0.0
        %276 = vmatprep.subr.mxu0 0.0
        %277 = vmatpush1.msra.mxu0 0.0
        %278 = vmatprep.subr.mxu0 0.0
        %279 = vmatpush1.msra.mxu0 0.0
        %280 = vmatprep.subr.mxu0 0.0
        %281 = vmatpush1.msra.mxu0 0.0
        %282 = vmatprep.subr.mxu0 0.0
        %283 = vmatpush1.msra.mxu0 0.0
        %284 = vmatprep.subr.mxu0 0.0
        %285 = vmatpush1.msra.mxu0 0.0
        %286 = vmatprep.subr.mxu0 0.0
        %287 = vmatpush1.msra.mxu0 0.0
        %288 = vmatprep.subr.mxu0 0.0
        %289 = vmatpush1.msra.mxu0 0.0
        %290 = vmatprep.subr.mxu0 0.0
        %291 = vmatpush1.msra.mxu0 0.0
        %292 = vmatprep.mubr.f32.mxu0 0.0
        %293 = vmatmul.mubr.f32.gmra.mrb[0].mxu0 %v223
        %v294 = vpop.f32.mrb[0].mxu0
        %v295 = vadd.f32 %v220, %v294
        %v296 = vpop.f32.mrb[0].mxu0
        %297 = vmatprep.mubr.f32.mxu0 0.0
        %298 = vmatmul.mubr.f32.gmra.mrb[0].mxu0 %v226
        %v299 = vpop.f32.mrb[0].mxu0
        %v300 = vadd.f32 %v220, %v299
        %v301 = vpop.f32.mrb[0].mxu0
        %302 = vdwg.mxu0
        %303 = vadd.xlane.f32.xlu0 %v295
        %v304 = vpop.xlane.xlu0 %303
        %305 = vadd.xlane.f32.xlu0 %v300
        %v306 = vpop.xlane.xlu0 %305
        %v307 = vmul.f32 %v295, %v295
        %v308 = vmul.f32 %v300, %v300
        %309 = vadd.xlane.f32.xlu0 %v307
        %v310 = vpop.xlane.xlu0 %309
        %311 = vadd.xlane.f32.xlu0 %v308
        %v312 = vpop.xlane.xlu0 %311
        %v313 = vmul.f32 %v304, 0.03125
        %v314 = vmul.f32 %v306, 0.03125
        %v315 = vmul.f32 %v310, 0.03125
        %v316 = vmul.f32 %v312, 0.03125
        %v317 = vmul.f32 %v313, %v313
        %v318 = vmul.f32 %v314, %v314
        %v319 = vsub.f32 %v315, %v317
        %v320 = vsub.f32 %v316, %v318
        %v321 = vmax.f32 %v319, 0.0
        %v322 = vmax.f32 %v320, 0.0
        %v323 = vadd.f32 %v321, 1e-05
        %v324 = vadd.f32 %v322, 1e-05
        %v325 = vrsqrt.pop %v323
        %v326 = vrsqrt.pop %v324
        %v327 = vsub.f32 %v295, %v313
        %v328 = vsub.f32 %v300, %v314
        %v329 = vmul.f32 %v327, %v325
        %v330 = vmul.f32 %v328, %v326
        %v331 = vlaneseq
        %v332 = vshrl.u32 %v331, 7
        %v333 = vsub.s32 1, %v332
        %v334 = vrot.slane %v216, %v333
        %v335 = vmul.f32 %v329, %v334
        %v336 = vmul.f32 %v330, %v334
        %v337 = vlaneseq
        %v338 = vshrl.u32 %v337, 7
        %v339 = vsub.s32 2, %v338
        %v340 = vrot.slane %v216, %v339
        %v341 = vadd.f32 %v335, %v340
        %v342 = vadd.f32 %v336, %v340
        %343 = vst [vmem:[%s203] sm:$0xff] %v341
        %344 = vst [vmem:[%s203 + $0x8] sm:$0xff] %v342
        %s345 = sand.u32 %s97, 1
        %s346 = scalar_lea.sflag [#allocation4], %s345
        %s347 = sand.u32 %s97, 1
        %s348 = smul.addr %s347, 16
        %s349 = scalar_lea.vmem [#allocation7], %s348
        // Predicated region
        $region41: #{tpu_custom_call.1} parent=31 // pred_check
          %p350 = pneg %p107
        $region42: #{tpu_custom_call.1} parent=31 // pred_check_branch
          %352 = sbr.rel (%p350) target = $region44
        $region43: #{tpu_custom_call.1} parent=31 // pred_region
          %s353 = smul.u32 2, %s21
          %s355 = ssub.s32 256, 256
          %356 = vsyncadd %s346, %s355
          %s357 = smul.addr %s353, 128
          %s358 = scalar_lea.hbm %s3, %s357
          %s359 = sshll.u32 %s349, 4
          %s360 = int_to_ptr.vmem [resolvable:$true] %s359
          %365 = dma.vmem_to_hbm [thread:$0]  %s360, 256, %s358, %s346, 128, 128, 8
        $region44: #{tpu_custom_call.1} parent=31 // pred_fallthru
          _
      $region32: #{tpu_custom_call.1} parent=5 // pred_fallthru
        _
      %p366 = scmp.le.s32.totalorder 2, %s16
      // Predicated region
      $region45: #{tpu_custom_call.1} parent=5 // pred_check
        %p367 = pneg %p366
      $region46: #{tpu_custom_call.1} parent=5 // pred_check_branch
        %369 = sbr.rel (%p367) target = $region48
      $region47: #{tpu_custom_call.1} parent=5 // pred_region
        %s370 = ssub.s32 %s16, 2
        // Predicated region
        $region49: #{tpu_custom_call.1} parent=47 // pred_check
          %p371 = pneg %p113
        $region50: #{tpu_custom_call.1} parent=47 // pred_check_branch
          %373 = sbr.rel (%p371) target = $region52
        $region51: #{tpu_custom_call.1} parent=47 // pred_region
          %s374 = sand.u32 %s98, 1
          %s375 = scalar_lea.sflag [#allocation4], %s374
          %s376 = sand.u32 %s98, 1
          %s377 = smul.addr %s376, 16
          %s378 = scalar_lea.vmem [#allocation7], %s377
          %379 = dma.done %s375, 256
        $region52: #{tpu_custom_call.1} parent=47 // pred_fallthru
          _
      $region48: #{tpu_custom_call.1} parent=5 // pred_fallthru
        _
    $region6: #{tpu_custom_call.1} parent=1 // loop_footer
      %s20 = sadd.s32 1, %s16
    $region7: #{tpu_custom_call.1} parent=1 // loop_footer_branch
      %15 = sbr.rel target = $region3
    $region8: #{tpu_custom_call.1} parent=1 // loop_exit
      _
    %380 = vsyncpa [#allocation3], 1
    %s381 = scalar_lea.sflag [#allocation3], 1
    %382 = vsyncpa %s381, 1
    %383 = vsyncpa [#allocation6], 1
    %384 = vsyncpa [#allocation4], 1
    %s385 = scalar_lea.sflag [#allocation4], 1
    %386 = vsyncpa %s385, 1

</llo_original>
